<compile_context>
chip_gen: v7x
topology: tpu7x:2x2x1
jax: 0.10.0
libtpu: 0.0.40
codegen_flags: <defaults>
</compile_context>

<pallas_src>
import math
import jax
import jax.numpy as jnp
from jax.experimental import pallas as pl
from jax.experimental.pallas import tpu as pltpu

_LANES = 128


def _voting_kernel(x_ref, w_ref, b_ref, o_ref):
    # x_ref: (6, TB) VMEM tile, feature-major (lanes = batch rows).
    # w_ref: (6, 1) resident VMEM weight column (DMA'd once, constant index_map).
    # b_ref: (1,) SMEM scalar bias.
    # o_ref: (1, TB) lane-dense VMEM output tile.
    x = x_ref[...].astype(jnp.float32)                # (6, TB)
    w = w_ref[...].astype(jnp.float32)                # (6, 1) -> lane-broadcast
    # VPU multiply + XLU sublane reduce over the 6 features; f32 accumulate.
    acc = jnp.sum(x * w, axis=0, keepdims=True)       # (1, TB)
    o_ref[...] = (acc + b_ref[0]).astype(o_ref.dtype)


def voting_forward(x, weight, bias, *, max_rows_per_step=65536):
    """Voting.forward: Linear(6, 1).

    x: (..., 6). weight: (1, 6) (PyTorch layout). bias: (1,). Returns (..., 1).
    """
    orig_shape = x.shape
    assert orig_shape[-1] == 6, "Voting expects last dim == 6"
    x2d = x.reshape(-1, 6)                            # glue reshape in plain JAX
    B = x2d.shape[0]

    nb = pl.cdiv(B, _LANES)                           # number of 128-row groups
    Bp = nb * _LANES                                  # rows padded to lane multiple

    # Rows per grid step (in 128-row groups): big enough to amortize the
    # ~0.35 us/step pipeline overhead, capped at ceil(nb/4) so large batches
    # keep >= ~4 grid steps for v7x's two TensorCores.  At 512 groups the
    # double-buffered VMEM footprint is ~8 MiB (input 2x2 MiB + sublane-padded
    # output 2x2 MiB) -- safe under v5e's 16 MiB default scoped VMEM.
    max_groups = max(1, max_rows_per_step // _LANES)
    tbg = max(1, min(max_groups, pl.cdiv(nb, 4)))
    tb = tbg * _LANES
    grid = (pl.cdiv(Bp, tb),)

    # Feature-major, lane-dense relayout: (B, 6) -> pad rows to Bp -> (6, Bp).
    # One XLA copy pass over x; see TODO(synk) above about fusing it upstream.
    xp = jnp.pad(x2d, ((0, Bp - B), (0, 0)))
    x_fm = xp.T                                       # (6, Bp)

    w_col = weight.reshape(6, 1).astype(jnp.float32)  # (6, 1) column for broadcast
    b_smem = bias.reshape(1).astype(jnp.float32)      # SMEM scalar

    out = pl.pallas_call(
        _voting_kernel,
        out_shape=jax.ShapeDtypeStruct((1, Bp), x.dtype),
        grid=grid,
        in_specs=[
            pl.BlockSpec((6, tb), lambda i: (0, i)),            # batch-tiled, lane-dense
            pl.BlockSpec((6, 1), lambda i: (0, 0)),             # resident weight
            pl.BlockSpec(memory_space=pltpu.MemorySpace.SMEM),  # scalar bias in SMEM
        ],
        out_specs=pl.BlockSpec((1, tb), lambda i: (0, i)),      # lane-dense output
        compiler_params=pltpu.CompilerParams(
            dimension_semantics=("parallel",),        # shard batch axis across TCs
        ),
        cost_estimate=pl.CostEstimate(
            flops=12 * Bp, transcendentals=0, bytes_accessed=28 * Bp + 28
        ),
    )(x_fm, w_col, b_smem)

    # (1, Bp) -> (Bp, 1) is a free contiguous reshape; slice off the row pad.
    out_col = out.reshape(Bp, 1)[:B]
    return out_col.reshape(*orig_shape[:-1], 1)


def init_voting_params(key):
    """Deterministic init matching nn.Linear(6, 1) default (uniform +/- 1/sqrt(6))."""
    k_w, k_b = jax.random.split(key)
    bound = 1.0 / math.sqrt(6.0)
    weight = jax.random.uniform(k_w, (1, 6), jnp.float32, minval=-bound, maxval=bound)
    bias = jax.random.uniform(k_b, (1,), jnp.float32, minval=-bound, maxval=bound)
    return weight, bias


if __name__ == "__main__":
    key = jax.random.PRNGKey(0)
    k_params, k_x1, k_x2 = jax.random.split(key, 3)

    weight, bias = init_voting_params(k_params)

    # Small multi-dim batch: 40 rows -> one 128-row group (exercises the
    # leading-dim flatten, row padding, and the single-step grid).
    x_small = jax.random.normal(k_x1, (4, 10, 6), dtype=jnp.float32)
    out_small = jax.block_until_ready(voting_forward(x_small, weight, bias))
    ref_small = x_small @ weight.T + bias
    assert out_small.shape == (4, 10, 1)
    assert jnp.allclose(out_small, ref_small, atol=1e-5, rtol=1e-5)

    # Ragged batch spanning several pipelined grid steps with a partial final
    # block: 1153 rows -> 10 row-groups, 3-group tiles -> 4 grid steps.
    x_large = jax.random.normal(k_x2, (1153, 6), dtype=jnp.float32)
    out_large = jax.block_until_ready(voting_forward(x_large, weight, bias))
    ref_large = x_large @ weight.T + bias
    assert out_large.shape == (1153, 1)
    assert jnp.allclose(out_large, ref_large, atol=1e-5, rtol=1e-5)

    print("KERNEL_OK")
</pallas_src>

<mosaic_0001>
module attributes {stable_mosaic.version = 11 : i64} {
  func.func @_voting_kernel(%arg0: i32, %arg1: memref<6x128xf32, #tpu.memory_space<vmem>>, %arg2: memref<6x1xf32, #tpu.memory_space<vmem>>, %arg3: memref<1xf32, #tpu.memory_space<smem>>, %arg4: memref<1x128xf32, #tpu.memory_space<vmem>>) attributes {dimension_semantics = [#tpu.dimension_semantics<parallel>], iteration_bounds = array<i64: 1>, scalar_prefetch = 0 : i64, scratch_operands = 0 : i64, tpu.core_type = #tpu.core_type<tc>, window_params = [{transform_indices = @transform_0, window_bounds = array<i64: 6, 128>}, {pipeline_mode = #tpu.pipeline_mode<synchronous>, transform_indices = @transform_1, window_bounds = array<i64: 6, 1>}, {transform_indices = @transform_2, window_bounds = array<i64: 1>}, {transform_indices = @transform_3, window_bounds = array<i64: 1, 128>}]} {
    %c0 = arith.constant 0 : index
    %c0_0 = arith.constant 0 : index
    %0 = vector.load %arg1[%c0, %c0_0] : memref<6x128xf32, #tpu.memory_space<vmem>>, vector<6x128xf32>
    %c0_1 = arith.constant 0 : index
    %c0_2 = arith.constant 0 : index
    %1 = vector.load %arg2[%c0_1, %c0_2] : memref<6x1xf32, #tpu.memory_space<vmem>>, vector<6x1xf32>
    %2 = vector.broadcast %1 : vector<6x1xf32> to vector<6x128xf32>
    %3 = arith.mulf %0, %2 : vector<6x128xf32>
    %cst = arith.constant dense<0.000000e+00> : vector<128xf32>
    %4 = vector.multi_reduction <add>, %3, %cst [0] : vector<6x128xf32> to vector<128xf32>
    %5 = vector.shape_cast %4 : vector<128xf32> to vector<1x128xf32>
    %c0_3 = arith.constant 0 : index
    %6 = memref.load %arg3[%c0_3] : memref<1xf32, #tpu.memory_space<smem>>
    %7 = vector.broadcast %6 : f32 to vector<1x128xf32>
    %8 = arith.addf %5, %7 : vector<1x128xf32>
    %c0_4 = arith.constant 0 : index
    %c0_5 = arith.constant 0 : index
    %9 = vector.load %arg4[%c0_4, %c0_5] : memref<1x128xf32, #tpu.memory_space<vmem>>, vector<1x128xf32>
    tpu.vector_store %arg4[%c0_4, %c0_5], %8 {strides = array<i32>} : memref<1x128xf32, #tpu.memory_space<vmem>>, vector<1x128xf32>,
    return
  }
  func.func @transform_0(%arg0: i32) -> (i32, i32) {
    %c0_i32 = arith.constant 0 : i32
    %c0_i32_0 = arith.constant 0 : i32
    return %c0_i32, %arg0 : i32, i32
  }
  func.func @transform_1(%arg0: i32) -> (i32, i32) {
    %c0_i32 = arith.constant 0 : i32
    %c0_i32_0 = arith.constant 0 : i32
    %c0_i32_1 = arith.constant 0 : i32
    return %c0_i32, %c0_i32_0 : i32, i32
  }
  func.func @transform_2(%arg0: i32) -> i32 {
    %c0_i32 = arith.constant 0 : i32
    %c0_i32_0 = arith.constant 0 : i32
    return %c0_i32 : i32
  }
  func.func @transform_3(%arg0: i32) -> (i32, i32) {
    %c0_i32 = arith.constant 0 : i32
    %c0_i32_0 = arith.constant 0 : i32
    return %c0_i32, %arg0 : i32, i32
  }
}

</mosaic_0001>

<llo_original>
// kernel: tpu_custom_call.1
$region0: #{tpu_custom_call.1}
  #allocation0 [shape = 'u32[]', space=smem, size = 0x4, offset = 0x4, fixed_abs, tag = 'smem constant byte address 0x4 - core index']
  #allocation1 [shape = 'u32[144,128]{1,0:T(1,128)}', space=vmem, size = 0x12000, scoped, tag = 'internal scratch']
  #allocation2 [shape = 'f32[1]{0:T(128)S(6)}', space=smem, size = 0x200, scoped, tag = 'scoped memory for tpu_custom_call.1']
  %s0 = inlined_call_operand.vmem [shape: f32[6,128], index: 0, kind: input, shape index: {}]
  %s1 = inlined_call_operand.vmem [shape: f32[6,1], index: 1, kind: input, shape index: {}]
  %s2 = inlined_call_operand.<no memory space> [shape: f32[1], index: 2, kind: input, shape index: {}]
  %s3 = inlined_call_operand.hbm [shape: f32[1,128], index: 3, kind: output, shape index: {}]
  %s4 = sld [smem:[#allocation0]]
  $region22: #{tpu_custom_call.1} parent=0
    _
  %s6 = ssub.s32 1, %s4
  %s7 = scalar_select 0, %s6, %s4
  %8 = sst [smem:[#allocation2]] %s2
  $region1: #{tpu_custom_call.1} parent=0
    #allocation3 [shape = 'u8[512]{0}', space=vmem, size = 0x400, scoped, tag = 'output window, operand 0, single buffered']
    #allocation4 [shape = 's32[1]{0}', space=sflag, size = 0x4, scoped, tag = 'scoped memory for tpu_custom_call.1']
    %9 = vsyncpa [#allocation4], 0
    // Predicated region
    $region2: #{tpu_custom_call.1} parent=1 // pred_check
      _
    $region3: #{tpu_custom_call.1} parent=1 // pred_check_branch
      %11 = sbr.rel (0) target = $region5
    $region4: #{tpu_custom_call.1} parent=1 // pred_region
      _
    $region5: #{tpu_custom_call.1} parent=1 // pred_fallthru
      _
    // Predicated region
    $region6: #{tpu_custom_call.1} parent=1 // pred_check
      _
    $region7: #{tpu_custom_call.1} parent=1 // pred_check_branch
      %13 = sbr.rel (0) target = $region9
    $region8: #{tpu_custom_call.1} parent=1 // pred_region
      _
    $region9: #{tpu_custom_call.1} parent=1 // pred_fallthru
      _
    // Predicated region
    $region10: #{tpu_custom_call.1} parent=1 // pred_check
      _
    $region11: #{tpu_custom_call.1} parent=1 // pred_check_branch
      %15 = sbr.rel (0) target = $region13
    $region12: #{tpu_custom_call.1} parent=1 // pred_region
      _
    $region13: #{tpu_custom_call.1} parent=1 // pred_fallthru
      _
    %v16 = vld [vmem:[%s0] sm:$0x3f]
    %v17 = vld [vmem:[%s1] sm:$0x3f]
    %19 = vset.pattern.permute.xlu0 0
    %20 = vperm.xlu0 %19, %v17
    %v21 = vpop.permute.xlu0 %20
    %v23 = vmul.f32 %v16, %v21
    %vm24 = vcmask 1045504
    %v25 = vsel %vm24, %v23, 0.0
    %v26 = vrot.slane %v25, 4
    %v27 = vadd.f32 %v25, %v26
    %v28 = vrot.slane %v27, 2
    %v29 = vadd.f32 %v27, %v28
    %v30 = vrot.slane %v29, 1
    %v31 = vadd.f32 %v29, %v30
    %s32 = sld [smem:[#allocation2]]
    %v33 = vstv %s32
    %v34 = vadd.f32 %v31, %v33
    %35 = vst [vmem:[#allocation3] sm:$0x1] %v34
    // Predicated region
    $region14: #{tpu_custom_call.1} parent=1 // pred_check
      _
    $region15: #{tpu_custom_call.1} parent=1 // pred_check_branch
      %37 = sbr.rel (0) target = $region17
    $region16: #{tpu_custom_call.1} parent=1 // pred_region
      %s39 = ssub.s32 16, 16
      %40 = vsyncadd [#allocation4], %s39
      %s42 = sshll.u32 [#allocation3], 4
      %s43 = int_to_ptr.vmem [resolvable:$true] %s42
      %45 = dma.vmem_to_hbm [thread:$0]  %s43, 16, %s3, [#allocation4]
    $region17: #{tpu_custom_call.1} parent=1 // pred_fallthru
      _
    // Predicated region
    $region18: #{tpu_custom_call.1} parent=1 // pred_check
      _
    $region19: #{tpu_custom_call.1} parent=1 // pred_check_branch
      %47 = sbr.rel (0) target = $region21
    $region20: #{tpu_custom_call.1} parent=1 // pred_region
      %48 = dma.done [#allocation4], 16
    $region21: #{tpu_custom_call.1} parent=1 // pred_fallthru
      _
    %49 = vsyncpa [#allocation4], 1

</llo_original>
